<compile_context>
chip_gen: v5e
topology: v5e:2x2
jax: 0.10.0
libtpu: 0.0.40
codegen_flags: <defaults>
</compile_context>

<pallas_src>
import math
import jax
import jax.numpy as jnp
from jax import lax
from jax.experimental import pallas as pl
from jax.experimental.pallas import tpu as pltpu

LANES = 128
BLOCK_ROWS = 512  # 512 x 128 f32 = 256 KiB per streamed block buffer


def _mlp_kernel(w1_ref, b1_ref, w2_ref, b2_ref, x_ref, o_ref):
    """Elementwise over the (block_rows, 128) batch tile:
         y = b2 + sum_j w2[j] * relu(w1[j] * x + b1[j])
       Weight reads are SMEM scalars that broadcast on the VPU; no MXU work."""
    hidden = w1_ref.shape[0]  # 200 (static)

    def body(j, acc):
        x = x_ref[...]                                    # (R, 128) f32
        h = jnp.maximum(x * w1_ref[j] + b1_ref[j], 0.0)   # VPU broadcast FMA + relu
        return acc + h * w2_ref[j]

    acc = lax.fori_loop(0, hidden, body, jnp.zeros(x_ref.shape, jnp.float32))
    o_ref[...] = (acc + b2_ref[0]).astype(o_ref.dtype)


def _round_up(a, b):
    return ((a + b - 1) // b) * b


def uq_net_mean_forward(x, w1, b1, w2, b2, *, block_rows=BLOCK_ROWS):
    """Pallas forward pass of UQ_Net_mean.

    x  : (N, 1) float32
    w1 : fc1 weight, reshapable to (200,)  (PyTorch fc1.weight[:, 0])
    b1 : fc1 bias   (200,)
    w2 : fc2 weight, reshapable to (200,)  (PyTorch fc2.weight[0, :])
    b2 : fc2 bias   (1,)
    returns (N, 1) float32
    """
    n = x.shape[0]
    w1 = jnp.asarray(w1, jnp.float32).reshape(-1)
    b1 = jnp.asarray(b1, jnp.float32).reshape(-1)
    w2 = jnp.asarray(w2, jnp.float32).reshape(-1)
    b2 = jnp.asarray(b2, jnp.float32).reshape(-1)

    # Lane-dense packing: (N, 1) -> (rows_padded, 128) with batch on lanes.
    rows = _round_up(pl.cdiv(n, LANES), 8)        # sublane-aligned row count
    br = min(block_rows, rows)                    # block rows (multiple of 8)
    rows_padded = _round_up(rows, br)
    n_padded = rows_padded * LANES
    x_tiles = jnp.pad(x.reshape(-1).astype(jnp.float32),
                      (0, n_padded - n)).reshape(rows_padded, LANES)

    grid = (rows_padded // br,)
    smem_spec = pl.BlockSpec(memory_space=pltpu.MemorySpace.SMEM)

    out = pl.pallas_call(
        _mlp_kernel,
        out_shape=jax.ShapeDtypeStruct((rows_padded, LANES), jnp.float32),
        grid=grid,
        in_specs=[
            smem_spec,                                    # w1 (resident in SMEM)
            smem_spec,                                    # b1
            smem_spec,                                    # w2
            smem_spec,                                    # b2
            pl.BlockSpec((br, LANES), lambda i: (i, 0)),  # streamed x blocks
        ],
        out_specs=pl.BlockSpec((br, LANES), lambda i: (i, 0)),
        compiler_params=pltpu.CompilerParams(
            dimension_semantics=("parallel",),            # megacore on v7x
            vmem_limit_bytes=16 * 1024 * 1024,            # safe on v5e/v6e/v7x
        ),
    )(w1, b1, w2, b2, x_tiles)

    return out.reshape(-1)[:n].reshape(n, 1)


def init_params(key):
    """Deterministic init matching nn.Linear's default U(-1/sqrt(fan_in), ...)."""
    k1, k2, k3, k4 = jax.random.split(key, 4)
    hidden = 200
    bound1 = 1.0 / math.sqrt(1.0)       # fc1: in_features = 1
    w1 = jax.random.uniform(k1, (hidden,), jnp.float32, -bound1, bound1)
    b1 = jax.random.uniform(k2, (hidden,), jnp.float32, -bound1, bound1)
    bound2 = 1.0 / math.sqrt(hidden)    # fc2: in_features = 200
    w2 = jax.random.uniform(k3, (hidden,), jnp.float32, -bound2, bound2)
    b2 = jax.random.uniform(k4, (1,), jnp.float32, -bound2, bound2)
    return w1, b1, w2, b2


if __name__ == "__main__":
    key = jax.random.PRNGKey(0)
    kx, kp = jax.random.split(key)

    # Small batch of normalized 1-D inputs, like xtrain_normal in the tutorial.
    batch = 8
    x = jax.random.normal(kx, (batch, 1), jnp.float32)

    w1, b1, w2, b2 = init_params(kp)

    out = jax.block_until_ready(uq_net_mean_forward(x, w1, b1, w2, b2))

    # Pure-JAX reference: relu(x @ W1 + b1) @ W2 + b2 with the same params.
    ref = jnp.maximum(x * w1[None, :] + b1[None, :], 0.0) @ w2[:, None] + b2[None, :]

    assert out.shape == (batch, 1)
    assert jnp.allclose(out, ref, atol=1e-4, rtol=1e-5), (out, ref)

    print("KERNEL_OK")
</pallas_src>

<mosaic_0001>
module attributes {stable_mosaic.version = 11 : i64} {
  func.func @_mlp_kernel(%arg0: i32, %arg1: memref<200xf32, #tpu.memory_space<smem>>, %arg2: memref<200xf32, #tpu.memory_space<smem>>, %arg3: memref<200xf32, #tpu.memory_space<smem>>, %arg4: memref<1xf32, #tpu.memory_space<smem>>, %arg5: memref<8x128xf32, #tpu.memory_space<vmem>>, %arg6: memref<8x128xf32, #tpu.memory_space<vmem>>) attributes {dimension_semantics = [#tpu.dimension_semantics<parallel>], iteration_bounds = array<i64: 1>, scalar_prefetch = 0 : i64, scratch_operands = 0 : i64, tpu.core_type = #tpu.core_type<tc>, window_params = [{transform_indices = @transform_0, window_bounds = array<i64: 200>}, {transform_indices = @transform_1, window_bounds = array<i64: 200>}, {transform_indices = @transform_2, window_bounds = array<i64: 200>}, {transform_indices = @transform_3, window_bounds = array<i64: 1>}, {transform_indices = @transform_4, window_bounds = array<i64: 8, 128>}, {transform_indices = @transform_5, window_bounds = array<i64: 8, 128>}]} {
    %cst = arith.constant 0.000000e+00 : f32
    %0 = vector.broadcast %cst : f32 to vector<8x128xf32>
    %c0_i32 = arith.constant 0 : i32
    %c200_i32 = arith.constant 200 : i32
    %1 = arith.addi %c0_i32, %c200_i32 : i32
    %c1_i32 = arith.constant 1 : i32
    %2 = scf.for %arg7 = %c0_i32 to %1 step %c1_i32 iter_args(%arg8 = %0) -> (vector<8x128xf32>)  : i32 {
      %c0_3 = arith.constant 0 : index
      %c0_4 = arith.constant 0 : index
      %7 = vector.load %arg5[%c0_3, %c0_4] : memref<8x128xf32, #tpu.memory_space<vmem>>, vector<8x128xf32>
      %8 = arith.index_cast %arg7 : i32 to index
      %9 = memref.load %arg1[%8] : memref<200xf32, #tpu.memory_space<smem>>
      %10 = vector.broadcast %9 : f32 to vector<8x128xf32>
      %11 = arith.mulf %7, %10 : vector<8x128xf32>
      %12 = arith.index_cast %arg7 : i32 to index
      %13 = memref.load %arg2[%12] : memref<200xf32, #tpu.memory_space<smem>>
      %14 = vector.broadcast %13 : f32 to vector<8x128xf32>
      %15 = arith.addf %11, %14 : vector<8x128xf32>
      %cst_5 = arith.constant 0.000000e+00 : f32
      %16 = vector.broadcast %cst_5 : f32 to vector<8x128xf32>
      %17 = arith.maximumf %15, %16 : vector<8x128xf32>
      %18 = arith.index_cast %arg7 : i32 to index
      %19 = memref.load %arg3[%18] : memref<200xf32, #tpu.memory_space<smem>>
      %20 = vector.broadcast %19 : f32 to vector<8x128xf32>
      %21 = arith.mulf %17, %20 : vector<8x128xf32>
      %22 = arith.addf %arg8, %21 : vector<8x128xf32>
      scf.yield %22 : vector<8x128xf32>
    }
    %c200_i32_0 = arith.constant 200 : i32
    %c0 = arith.constant 0 : index
    %3 = memref.load %arg4[%c0] : memref<1xf32, #tpu.memory_space<smem>>
    %4 = vector.broadcast %3 : f32 to vector<8x128xf32>
    %5 = arith.addf %2, %4 : vector<8x128xf32>
    %c0_1 = arith.constant 0 : index
    %c0_2 = arith.constant 0 : index
    %6 = vector.load %arg6[%c0_1, %c0_2] : memref<8x128xf32, #tpu.memory_space<vmem>>, vector<8x128xf32>
    tpu.vector_store %arg6[%c0_1, %c0_2], %5 {strides = array<i32>} : memref<8x128xf32, #tpu.memory_space<vmem>>, vector<8x128xf32>,
    return
  }
  func.func @transform_0(%arg0: i32) -> i32 {
    %c0_i32 = arith.constant 0 : i32
    %c0_i32_0 = arith.constant 0 : i32
    return %c0_i32 : i32
  }
  func.func @transform_1(%arg0: i32) -> i32 {
    %c0_i32 = arith.constant 0 : i32
    %c0_i32_0 = arith.constant 0 : i32
    return %c0_i32 : i32
  }
  func.func @transform_2(%arg0: i32) -> i32 {
    %c0_i32 = arith.constant 0 : i32
    %c0_i32_0 = arith.constant 0 : i32
    return %c0_i32 : i32
  }
  func.func @transform_3(%arg0: i32) -> i32 {
    %c0_i32 = arith.constant 0 : i32
    %c0_i32_0 = arith.constant 0 : i32
    return %c0_i32 : i32
  }
  func.func @transform_4(%arg0: i32) -> (i32, i32) {
    %c0_i32 = arith.constant 0 : i32
    %c0_i32_0 = arith.constant 0 : i32
    return %arg0, %c0_i32 : i32, i32
  }
  func.func @transform_5(%arg0: i32) -> (i32, i32) {
    %c0_i32 = arith.constant 0 : i32
    %c0_i32_0 = arith.constant 0 : i32
    return %arg0, %c0_i32 : i32, i32
  }
}

</mosaic_0001>

<llo_original>
// kernel: tpu_custom_call.1
$region0: #{tpu_custom_call.1}
  #allocation0 [shape = 'u32[]', space=smem, size = 0x4, offset = 0x4, fixed_abs, tag = 'smem constant byte address 0x4 - core index']
  #allocation1 [shape = 'u32[72,128]{1,0:T(1,128)}', space=vmem, size = 0x9000, scoped, tag = 'internal scratch']
  #allocation2 [shape = 'f32[1]{0:T(128)S(6)}', space=smem, size = 0x200, scoped, tag = 'scoped memory for tpu_custom_call.1']
  %s0 = inlined_call_operand.vmem [shape: f32[200], index: 0, kind: input, shape index: {}]
  %s1 = inlined_call_operand.hbm [shape: f32[200], index: 1, kind: input, shape index: {}]
  %s2 = inlined_call_operand.hbm [shape: f32[200], index: 2, kind: input, shape index: {}]
  %s3 = inlined_call_operand.<no memory space> [shape: f32[1], index: 3, kind: input, shape index: {}]
  %s4 = inlined_call_operand.hbm [shape: f32[8,128], index: 4, kind: input, shape index: {}]
  %s5 = inlined_call_operand.hbm [shape: f32[8,128], index: 5, kind: output, shape index: {}]
  %s6 = sld [smem:[#allocation0]]
  $region53: #{tpu_custom_call.1} parent=0
    _
  %s8 = ssub.s32 1, %s6
  %s9 = scalar_select 0, %s8, %s6
  %10 = sst [smem:[#allocation2]] %s3
  $region1: #{tpu_custom_call.1} parent=0
    #allocation3 [shape = 'u8[1024]{0}', space=smem, size = 0x400, scoped, tag = 'input window, operand 0, single buffered']
    #allocation4 [shape = 's32[1]{0}', space=sflag, size = 0x4, scoped, tag = 'scoped memory for tpu_custom_call.1']
    #allocation5 [shape = 's32[1]{0}', space=sflag, size = 0x4, scoped, tag = 'scoped memory for tpu_custom_call.1']
    #allocation6 [shape = 's32[1]{0}', space=sflag, size = 0x4, scoped, tag = 'scoped memory for tpu_custom_call.1']
    #allocation7 [shape = 's32[1]{0}', space=sflag, size = 0x4, scoped, tag = 'scoped memory for tpu_custom_call.1']
    #allocation8 [shape = 'u8[1024]{0}', space=smem, size = 0x400, scoped, tag = 'input window, operand 1, single buffered']
    #allocation9 [shape = 'u8[1024]{0}', space=smem, size = 0x400, scoped, tag = 'input window, operand 2, single buffered']
    #allocation10 [shape = 's32[1]{0}', space=sflag, size = 0x4, scoped, tag = 'scoped memory for tpu_custom_call.1']
    #allocation11 [shape = 'u8[4096]{0}', space=vmem, size = 0x1000, scoped, tag = 'input window, operand 4, single buffered']
    #allocation12 [shape = 'u8[4096]{0}', space=vmem, size = 0x1000, scoped, tag = 'output window, operand 0, single buffered']
    %11 = vsyncpa [#allocation7], 0
    %12 = vsyncpa [#allocation6], 0
    %13 = vsyncpa [#allocation10], 0
    %14 = vsyncpa [#allocation4], 0
    %15 = vsyncpa [#allocation5], 0
    // Predicated region
    $region2: #{tpu_custom_call.1} parent=1 // pred_check
      _
    $region3: #{tpu_custom_call.1} parent=1 // pred_check_branch
      %17 = sbr.rel (0) target = $region5
    $region4: #{tpu_custom_call.1} parent=1 // pred_region
      %19 = vsyncadd [#allocation7], 0
      %s21 = sshll.u32 %s0, 4
      %s22 = int_to_ptr.vmem [resolvable:$true] %s21
      %24 = dma.vmem_to_smem %s22, 32, [#allocation3], [#allocation7]
    $region5: #{tpu_custom_call.1} parent=1 // pred_fallthru
      _
    // Predicated region
    $region6: #{tpu_custom_call.1} parent=1 // pred_check
      _
    $region7: #{tpu_custom_call.1} parent=1 // pred_check_branch
      %26 = sbr.rel (0) target = $region9
    $region8: #{tpu_custom_call.1} parent=1 // pred_region
      %28 = vsyncadd [#allocation6], 0
      %s30 = sshll.u32 %s1, 4
      %s31 = int_to_ptr.hbm [resolvable:$true] %s30
      %33 = dma.hbm_to_smem %s31, 32, [#allocation8], [#allocation6]
    $region9: #{tpu_custom_call.1} parent=1 // pred_fallthru
      _
    // Predicated region
    $region10: #{tpu_custom_call.1} parent=1 // pred_check
      _
    $region11: #{tpu_custom_call.1} parent=1 // pred_check_branch
      %35 = sbr.rel (0) target = $region13
    $region12: #{tpu_custom_call.1} parent=1 // pred_region
      %37 = vsyncadd [#allocation10], 0
      %s39 = sshll.u32 %s2, 4
      %s40 = int_to_ptr.hbm [resolvable:$true] %s39
      %42 = dma.hbm_to_smem %s40, 32, [#allocation9], [#allocation10]
    $region13: #{tpu_custom_call.1} parent=1 // pred_fallthru
      _
    // Predicated region
    $region14: #{tpu_custom_call.1} parent=1 // pred_check
      _
    $region15: #{tpu_custom_call.1} parent=1 // pred_check_branch
      %44 = sbr.rel (0) target = $region17
    $region16: #{tpu_custom_call.1} parent=1 // pred_region
      _
    $region17: #{tpu_custom_call.1} parent=1 // pred_fallthru
      _
    // Predicated region
    $region18: #{tpu_custom_call.1} parent=1 // pred_check
      _
    $region19: #{tpu_custom_call.1} parent=1 // pred_check_branch
      %46 = sbr.rel (0) target = $region21
    $region20: #{tpu_custom_call.1} parent=1 // pred_region
      %48 = vsyncadd [#allocation4], 0
      %s50 = sshll.u32 %s4, 4
      %s51 = int_to_ptr.hbm [resolvable:$true] %s50
      %s52 = sshll.u32 [#allocation11], 4
      %s53 = int_to_ptr.vmem [resolvable:$true] %s52
      %55 = dma.hbm_to_vmem [thread:$0]  %s51, 128, %s53, [#allocation4]
    $region21: #{tpu_custom_call.1} parent=1 // pred_fallthru
      _
    // Predicated region
    $region22: #{tpu_custom_call.1} parent=1 // pred_check
      _
    $region23: #{tpu_custom_call.1} parent=1 // pred_check_branch
      %57 = sbr.rel (0) target = $region25
    $region24: #{tpu_custom_call.1} parent=1 // pred_region
      %59 = dma.done [#allocation7], 32
    $region25: #{tpu_custom_call.1} parent=1 // pred_fallthru
      _
    // Predicated region
    $region26: #{tpu_custom_call.1} parent=1 // pred_check
      _
    $region27: #{tpu_custom_call.1} parent=1 // pred_check_branch
      %61 = sbr.rel (0) target = $region29
    $region28: #{tpu_custom_call.1} parent=1 // pred_region
      %63 = dma.done [#allocation6], 32
    $region29: #{tpu_custom_call.1} parent=1 // pred_fallthru
      _
    // Predicated region
    $region30: #{tpu_custom_call.1} parent=1 // pred_check
      _
    $region31: #{tpu_custom_call.1} parent=1 // pred_check_branch
      %65 = sbr.rel (0) target = $region33
    $region32: #{tpu_custom_call.1} parent=1 // pred_region
      %67 = dma.done [#allocation10], 32
    $region33: #{tpu_custom_call.1} parent=1 // pred_fallthru
      _
    // Predicated region
    $region34: #{tpu_custom_call.1} parent=1 // pred_check
      _
    $region35: #{tpu_custom_call.1} parent=1 // pred_check_branch
      %69 = sbr.rel (0) target = $region37
    $region36: #{tpu_custom_call.1} parent=1 // pred_region
      %71 = dma.done [#allocation4], 128
    $region37: #{tpu_custom_call.1} parent=1 // pred_fallthru
      _
    %72 = sfence
    loop: start=0, step=1, limit=200
    $region38: #{tpu_custom_call.1} parent=1 // loop_pre_header
      _
    $region39: #{tpu_custom_call.1} parent=1 // loop_header
      %s74 = sphi 0, %s78
      %p75 = scmp.ge.s32.totalorder %s74, 200
      %v79 = vphi 0.0, %v91
    $region40: #{tpu_custom_call.1} parent=1 // loop_header_branch
      %77 = sbr.rel (%p75) target = $region44
    $region41: #{tpu_custom_call.1} parent=1 // loop_body
      %v80 = vld [vmem:[#allocation11] sm:$0xff]
      %s81 = sld [smem:[#allocation3 + %s74]]
      %v82 = vstv %s81
      %v83 = vmul.f32 %v80, %v82
      %s84 = sld [smem:[#allocation8 + %s74]]
      %v85 = vstv %s84
      %v86 = vadd.f32 %v83, %v85
      %v87 = vmax.f32 %v86, 0.0
      %s88 = sld [smem:[#allocation9 + %s74]]
      %v89 = vstv %s88
      %v90 = vmul.f32 %v87, %v89
      %v91 = vadd.f32 %v79, %v90
    $region42: #{tpu_custom_call.1} parent=1 // loop_footer
      %s78 = sadd.s32 1, %s74
    $region43: #{tpu_custom_call.1} parent=1 // loop_footer_branch
      %73 = sbr.rel target = $region39
    $region44: #{tpu_custom_call.1} parent=1 // loop_exit
      _
    %s92 = sld [smem:[#allocation2]]
    %v93 = vstv %s92
    %v94 = vadd.f32 %v79, %v93
    %95 = vst [vmem:[#allocation12] sm:$0xff] %v94
    // Predicated region
    $region45: #{tpu_custom_call.1} parent=1 // pred_check
      _
    $region46: #{tpu_custom_call.1} parent=1 // pred_check_branch
      %97 = sbr.rel (0) target = $region48
    $region47: #{tpu_custom_call.1} parent=1 // pred_region
      %99 = vsyncadd [#allocation5], 0
      %s101 = sshll.u32 [#allocation12], 4
      %s102 = int_to_ptr.vmem [resolvable:$true] %s101
      %s103 = sshll.u32 %s5, 4
      %s104 = int_to_ptr.hbm [resolvable:$true] %s103
      %106 = dma.vmem_to_hbm [thread:$0]  %s102, 128, %s104, [#allocation5]
    $region48: #{tpu_custom_call.1} parent=1 // pred_fallthru
      _
    // Predicated region
    $region49: #{tpu_custom_call.1} parent=1 // pred_check
      _
    $region50: #{tpu_custom_call.1} parent=1 // pred_check_branch
      %108 = sbr.rel (0) target = $region52
    $region51: #{tpu_custom_call.1} parent=1 // pred_region
      %110 = dma.done [#allocation5], 128
    $region52: #{tpu_custom_call.1} parent=1 // pred_fallthru
      _
    %111 = vsyncpa [#allocation4], 1
    %112 = vsyncpa [#allocation5], 1
    %113 = vsyncpa [#allocation6], 1
    %114 = vsyncpa [#allocation10], 1
    %115 = vsyncpa [#allocation7], 1

</llo_original>
